<compile_context>
chip_gen: v6e
topology: v6e:2x2x1
jax: 0.10.0
libtpu: 0.0.40
codegen_flags: <defaults>
</compile_context>

<pallas_src>
import functools

import jax
import jax.numpy as jnp
from jax.experimental import pallas as pl
from jax.experimental.pallas import tpu as pltpu

_MIB = 1024 * 1024
_PIPELINE_BUDGET_BYTES = 32 * _MIB   # 2x in + 2x out double-buffered tiles
_TARGET_TILE_BYTES = 6 * _MIB        # 4-8 MiB per review


def _sublane_multiple(dtype) -> int:
    itemsize = jnp.dtype(dtype).itemsize
    return {4: 8, 2: 16, 1: 32}.get(itemsize, 8)


def _vmem_limit(tile_bytes_list) -> int:
    need = 2 * sum(tile_bytes_list) + 2 * _MIB     # double-buffered + margin
    return int(min(48 * _MIB, max(8 * _MIB, need)))


# ----------------------------------------------------------------------------
# Fast path: one pass, row-blocked, full-width rows.
# ----------------------------------------------------------------------------
def _threshold_rows_kernel(ms_ref, x_ref, o_ref):
    # ms_ref: SMEM (1,) f32 = mean_scalar / (H*W)   (mean fold -> one multiply)
    # x_ref / o_ref: (tr, H*W) tile of flattened (n, c) rows.
    x = x_ref[...]
    s = jnp.sum(x, axis=-1, keepdims=True, dtype=jnp.float32)  # f32 accumulate
    thresh = (s * ms_ref[0]).astype(x.dtype)
    # compare + select in native dtype (no f32 materialization of the tile).
    o_ref[...] = jnp.where(x > thresh, x, jnp.zeros_like(x))


def _row_path(ms, x2, rows, cols, itemsize, sub, max_tile_bytes, min_tr):
    row_bytes = cols * itemsize
    tile_bytes = min(_TARGET_TILE_BYTES, max_tile_bytes)

    tr = max(min_tr, (tile_bytes // row_bytes) // sub * sub)
    tr = min(tr, rows)
    if rows > sub:
        # Keep >= ~8 grid steps so the "parallel" axis load-balances both
        # TensorCores on v7x (no-op for small row counts / single-TC chips).
        tr_for_steps = ((pl.cdiv(rows, 8) + sub - 1) // sub) * sub
        tr = min(tr, max(sub, tr_for_steps))
    tr = max(1, tr)

    grid = (pl.cdiv(rows, tr),)
    tile = tr * row_bytes

    return pl.pallas_call(
        _threshold_rows_kernel,
        out_shape=jax.ShapeDtypeStruct((rows, cols), x2.dtype),
        grid_spec=pltpu.PrefetchScalarGridSpec(
            num_scalar_prefetch=1,            # mean_scalar/(H*W) -> SMEM
            grid=grid,
            in_specs=[pl.BlockSpec((tr, cols), lambda i, ms_ref: (i, 0))],
            out_specs=pl.BlockSpec((tr, cols), lambda i, ms_ref: (i, 0)),
        ),
        compiler_params=pltpu.CompilerParams(
            dimension_semantics=("parallel",),
            vmem_limit_bytes=_vmem_limit([tile, tile]),
        ),
        cost_estimate=pl.CostEstimate(
            flops=2 * rows * cols,
            transcendentals=0,
            bytes_accessed=2 * rows * cols * itemsize,
        ),
    )(ms, x2)


# ----------------------------------------------------------------------------
# Fallback path (very wide rows): column-tiled, two passes.
# ----------------------------------------------------------------------------
def _row_sum_kernel(x_ref, sum_ref, *, cols, tc):
    k = pl.program_id(1)

    @pl.when(k == 0)
    def _init():
        sum_ref[...] = jnp.zeros_like(sum_ref)

    x = x_ref[...].astype(jnp.float32)
    if cols % tc != 0:
        # Mask padded lanes of the partial last column block.
        lane = jax.lax.broadcasted_iota(jnp.int32, x.shape, 1) + k * tc
        x = jnp.where(lane < cols, x, 0.0)
    sum_ref[...] += jnp.sum(x, axis=-1, keepdims=True)


def _apply_threshold_kernel(ms_ref, x_ref, sum_ref, o_ref):
    x = x_ref[...]
    thresh = (sum_ref[...] * ms_ref[0]).astype(x.dtype)
    o_ref[...] = jnp.where(x > thresh, x, jnp.zeros_like(x))


def _col_path(ms, x2, rows, cols, itemsize, sub, max_tile_bytes, min_tr):
    tr = min_tr                                   # sublane multiple (or full rows)
    tc = max(128, (max_tile_bytes // max(1, tr * itemsize)) // 128 * 128)
    if tc >= cols:
        tc = cols                                 # full-width block is legal
    grid_rows = pl.cdiv(rows, tr)
    grid_cols = pl.cdiv(cols, tc)
    x_tile = tr * tc * itemsize
    sum_tile = tr * 4

    # Pass 1: per-row sums (f32), column axis is a resident-output reduction.
    sums = pl.pallas_call(
        functools.partial(_row_sum_kernel, cols=cols, tc=tc),
        out_shape=jax.ShapeDtypeStruct((rows, 1), jnp.float32),
        grid_spec=pltpu.PrefetchScalarGridSpec(
            num_scalar_prefetch=0,
            grid=(grid_rows, grid_cols),
            in_specs=[pl.BlockSpec((tr, tc), lambda i, k: (i, k))],
            out_specs=pl.BlockSpec((tr, 1), lambda i, k: (i, 0)),
        ),
        compiler_params=pltpu.CompilerParams(
            dimension_semantics=("parallel", "arbitrary"),
            vmem_limit_bytes=_vmem_limit([x_tile, sum_tile]),
        ),
        cost_estimate=pl.CostEstimate(
            flops=rows * cols,
            transcendentals=0,
            bytes_accessed=rows * cols * itemsize + rows * 4,
        ),
    )(x2)

    # Pass 2: elementwise threshold, tiled over rows x cols.
    out2 = pl.pallas_call(
        _apply_threshold_kernel,
        out_shape=jax.ShapeDtypeStruct((rows, cols), x2.dtype),
        grid_spec=pltpu.PrefetchScalarGridSpec(
            num_scalar_prefetch=1,
            grid=(grid_rows, grid_cols),
            in_specs=[
                pl.BlockSpec((tr, tc), lambda i, k, ms_ref: (i, k)),
                pl.BlockSpec((tr, 1), lambda i, k, ms_ref: (i, 0)),
            ],
            out_specs=pl.BlockSpec((tr, tc), lambda i, k, ms_ref: (i, k)),
        ),
        compiler_params=pltpu.CompilerParams(
            dimension_semantics=("parallel", "parallel"),
            vmem_limit_bytes=_vmem_limit([x_tile, sum_tile, x_tile]),
        ),
        cost_estimate=pl.CostEstimate(
            flops=2 * rows * cols,
            transcendentals=0,
            bytes_accessed=2 * rows * cols * itemsize + rows * 4,
        ),
    )(ms, x2, sums)
    return out2


# ----------------------------------------------------------------------------
# Wrapper
# ----------------------------------------------------------------------------
def adaptive_threshold(x: jax.Array, mean_scalar: float = 1.0, *,
                       pipeline_budget_bytes: int = _PIPELINE_BUDGET_BYTES
                       ) -> jax.Array:
    """x: (N, C, H, W). Returns x * (x > spatial_mean(x) * mean_scalar)."""
    N, C, H, W = x.shape
    rows, cols = N * C, H * W
    x2 = x.reshape(rows, cols)

    itemsize = jnp.dtype(x.dtype).itemsize
    sub = _sublane_multiple(x.dtype)
    max_tile_bytes = max(1, pipeline_budget_bytes // 4)   # 4 pipelined buffers
    min_tr = rows if rows < sub else sub

    # Fold 1/(H*W) of the mean into the runtime scalar (SMEM prefetch).
    ms = jnp.asarray([mean_scalar / cols], dtype=jnp.float32)

    if min_tr * cols * itemsize <= max_tile_bytes:
        out2 = _row_path(ms, x2, rows, cols, itemsize, sub, max_tile_bytes, min_tr)
    else:
        # Guard: a minimal full-width row block would not fit the VMEM budget
        # (e.g. H*W ~ 1M f32 elements) -> column-tiled two-pass path.
        out2 = _col_path(ms, x2, rows, cols, itemsize, sub, max_tile_bytes, min_tr)

    return out2.reshape(N, C, H, W)


def _reference(x, mean_scalar=1.0):
    means = jnp.mean(x, axis=(2, 3), keepdims=True)
    return x * (x > means * mean_scalar).astype(x.dtype)


if __name__ == "__main__":
    key = jax.random.PRNGKey(0)

    # 1) Typical small shape -> fast row path; two runtime scalar values.
    x1 = jax.random.normal(key, (2, 4, 16, 16), dtype=jnp.float32)
    for ms_val in (1.0, 0.5):
        out = jax.block_until_ready(adaptive_threshold(x1, ms_val))
        ref = _reference(x1, ms_val)
        assert out.shape == x1.shape
        assert jnp.allclose(out, ref, atol=1e-5, rtol=1e-5), f"row path mismatch (ms={ms_val})"

    # 2) Row count not a multiple of the block size -> partial last row block.
    x2 = jax.random.normal(jax.random.PRNGKey(1), (3, 5, 16, 16), dtype=jnp.float32)
    out = jax.block_until_ready(adaptive_threshold(x2, 1.0))
    assert jnp.allclose(out, _reference(x2, 1.0), atol=1e-5, rtol=1e-5), "partial row block mismatch"

    # 3) Non-128-multiple spatial size; also force the column-tiled fallback
    #    path with a tiny VMEM budget to exercise its masked reduction.
    x3 = jax.random.normal(jax.random.PRNGKey(2), (2, 4, 10, 20), dtype=jnp.float32)
    out_row = jax.block_until_ready(adaptive_threshold(x3, 1.0))
    out_col = jax.block_until_ready(
        adaptive_threshold(x3, 1.0, pipeline_budget_bytes=4096))
    ref3 = _reference(x3, 1.0)
    assert jnp.allclose(out_row, ref3, atol=1e-5, rtol=1e-5), "non-128 cols row path mismatch"
    assert jnp.allclose(out_col, ref3, atol=1e-5, rtol=1e-5), "column-tiled fallback mismatch"

    print("KERNEL_OK")
</pallas_src>

<mosaic_0001>
module attributes {stable_mosaic.version = 11 : i64} {
  func.func @_threshold_rows_kernel(%arg0: i32, %arg1: memref<1xf32, #tpu.memory_space<smem>>, %arg2: memref<8x256xf32, #tpu.memory_space<vmem>>, %arg3: memref<8x256xf32, #tpu.memory_space<vmem>>) attributes {dimension_semantics = [#tpu.dimension_semantics<parallel>], iteration_bounds = array<i64: 1>, scalar_prefetch = 1 : i64, scratch_operands = 0 : i64, tpu.core_type = #tpu.core_type<tc>, window_params = [{transform_indices = @transform_0, window_bounds = array<i64: 8, 256>}, {transform_indices = @transform_1, window_bounds = array<i64: 8, 256>}]} {
    %c0 = arith.constant 0 : index
    %c0_0 = arith.constant 0 : index
    %0 = vector.load %arg2[%c0, %c0_0] : memref<8x256xf32, #tpu.memory_space<vmem>>, vector<8x256xf32>
    %cst = arith.constant dense<0.000000e+00> : vector<8xf32>
    %1 = vector.multi_reduction <add>, %0, %cst [1] : vector<8x256xf32> to vector<8xf32>
    %2 = vector.shape_cast %1 : vector<8xf32> to vector<8x1xf32>
    %c0_1 = arith.constant 0 : index
    %3 = memref.load %arg1[%c0_1] : memref<1xf32, #tpu.memory_space<smem>>
    %4 = vector.broadcast %3 : f32 to vector<8x1xf32>
    %5 = arith.mulf %2, %4 : vector<8x1xf32>
    %6 = vector.broadcast %5 : vector<8x1xf32> to vector<8x256xf32>
    %7 = arith.cmpf ogt, %0, %6 : vector<8x256xf32>
    %cst_2 = arith.constant 0.000000e+00 : f32
    %8 = vector.broadcast %cst_2 : f32 to vector<8x256xf32>
    %9 = arith.select %7, %0, %8 : vector<8x256xi1>, vector<8x256xf32>
    %c0_3 = arith.constant 0 : index
    %c0_4 = arith.constant 0 : index
    %10 = vector.load %arg3[%c0_3, %c0_4] : memref<8x256xf32, #tpu.memory_space<vmem>>, vector<8x256xf32>
    tpu.vector_store %arg3[%c0_3, %c0_4], %9 {strides = array<i32>} : memref<8x256xf32, #tpu.memory_space<vmem>>, vector<8x256xf32>,
    return
  }
  func.func @transform_0(%arg0: i32, %arg1: memref<1xf32, #tpu.memory_space<smem>>) -> (i32, i32) {
    %c0_i32 = arith.constant 0 : i32
    %c0_i32_0 = arith.constant 0 : i32
    return %arg0, %c0_i32 : i32, i32
  }
  func.func @transform_1(%arg0: i32, %arg1: memref<1xf32, #tpu.memory_space<smem>>) -> (i32, i32) {
    %c0_i32 = arith.constant 0 : i32
    %c0_i32_0 = arith.constant 0 : i32
    return %arg0, %c0_i32 : i32, i32
  }
}

</mosaic_0001>

<llo_original>
// kernel: tpu_custom_call.1
$region0: #{tpu_custom_call.1}
  #allocation0 [shape = 'u32[]', space=smem, size = 0x4, offset = 0x4, fixed_abs, tag = 'smem constant byte address 0x4 - core index']
  #allocation1 [shape = 'u32[144,128]{1,0:T(1,128)}', space=vmem, size = 0x12000, scoped, tag = 'internal scratch']
  #allocation2 [shape = 's32[1]{0}', space=sflag, size = 0x4, scoped, tag = 'scoped memory for tpu_custom_call.1']
  #allocation3 [shape = 'f32[1]{0:T(128)S(6)}', space=smem, size = 0x200, scoped, tag = 'prefetched SMEM operand 0']
  %s0 = inlined_call_operand.<no memory space> [shape: f32[1], index: 0, kind: input, shape index: {}]
  %s1 = inlined_call_operand.hbm [shape: f32[8,256], index: 1, kind: input, shape index: {}]
  %s2 = inlined_call_operand.hbm [shape: f32[8,256], index: 2, kind: output, shape index: {}]
  %s3 = sld [smem:[#allocation0]]
  $region18: #{tpu_custom_call.1} parent=0
    _
  %s5 = ssub.s32 1, %s3
  %s6 = scalar_select 0, %s5, %s3
  %7 = sst [smem:[#allocation3]] %s0
  $region1: #{tpu_custom_call.1} parent=0
    #allocation4 [shape = 'u8[8192]{0}', space=vmem, size = 0x2000, scoped, tag = 'input window, operand 1, single buffered']
    #allocation5 [shape = 's32[1]{0}', space=sflag, size = 0x4, scoped, tag = 'scoped memory for tpu_custom_call.1']
    #allocation6 [shape = 's32[1]{0}', space=sflag, size = 0x4, scoped, tag = 'scoped memory for tpu_custom_call.1']
    #allocation7 [shape = 'u8[8192]{0}', space=vmem, size = 0x2000, scoped, tag = 'output window, operand 0, single buffered']
    %8 = vsyncpa [#allocation5], 0
    %9 = vsyncpa [#allocation6], 0
    // Predicated region
    $region2: #{tpu_custom_call.1} parent=1 // pred_check
      _
    $region3: #{tpu_custom_call.1} parent=1 // pred_check_branch
      %11 = sbr.rel (0) target = $region5
    $region4: #{tpu_custom_call.1} parent=1 // pred_region
      %s13 = ssub.s32 256, 256
      %14 = vsyncadd [#allocation5], %s13
      %s16 = sshll.u32 [#allocation4], 4
      %s17 = int_to_ptr.vmem [resolvable:$true] %s16
      %19 = dma.hbm_to_vmem [thread:$0]  %s1, 256, %s17, [#allocation5]
    $region5: #{tpu_custom_call.1} parent=1 // pred_fallthru
      _
    // Predicated region
    $region6: #{tpu_custom_call.1} parent=1 // pred_check
      _
    $region7: #{tpu_custom_call.1} parent=1 // pred_check_branch
      %21 = sbr.rel (0) target = $region9
    $region8: #{tpu_custom_call.1} parent=1 // pred_region
      %22 = dma.done [#allocation5], 256
    $region9: #{tpu_custom_call.1} parent=1 // pred_fallthru
      _
    %v23 = vld [vmem:[#allocation4] sm:$0xff]
    %v24 = vld [vmem:[#allocation4 + $0x8] sm:$0xff]
    %v25 = vadd.f32 %v23, %v24
    %26 = vadd.xlane.f32.xlu0 %v25
    %v27 = vpop.xlane.xlu0 %26
    %s28 = sld [smem:[#allocation3]]
    %v29 = vstv %s28
    %v30 = vmul.f32 %v27, %v29
    %vm31 = vcmp.gt.f32.partialorder %v23, %v30
    %vm32 = vcmp.gt.f32.partialorder %v24, %v30
    %v33 = vsel %vm31, %v23, 0.0
    %v34 = vsel %vm32, %v24, 0.0
    %35 = vst [vmem:[#allocation7] sm:$0xff] %v33
    %36 = vst [vmem:[#allocation7 + $0x8] sm:$0xff] %v34
    // Predicated region
    $region10: #{tpu_custom_call.1} parent=1 // pred_check
      _
    $region11: #{tpu_custom_call.1} parent=1 // pred_check_branch
      %38 = sbr.rel (0) target = $region13
    $region12: #{tpu_custom_call.1} parent=1 // pred_region
      %s40 = ssub.s32 256, 256
      %41 = vsyncadd [#allocation6], %s40
      %s43 = sshll.u32 [#allocation7], 4
      %s44 = int_to_ptr.vmem [resolvable:$true] %s43
      %46 = dma.vmem_to_hbm [thread:$0]  %s44, 256, %s2, [#allocation6]
    $region13: #{tpu_custom_call.1} parent=1 // pred_fallthru
      _
    // Predicated region
    $region14: #{tpu_custom_call.1} parent=1 // pred_check
      _
    $region15: #{tpu_custom_call.1} parent=1 // pred_check_branch
      %48 = sbr.rel (0) target = $region17
    $region16: #{tpu_custom_call.1} parent=1 // pred_region
      %49 = dma.done [#allocation6], 256
    $region17: #{tpu_custom_call.1} parent=1 // pred_fallthru
      _
    %50 = vsyncpa [#allocation5], 1
    %51 = vsyncpa [#allocation6], 1

</llo_original>
